<compile_context>
chip_gen: v7x
topology: tpu7x:2x2x1
jax: 0.10.0
libtpu: 0.0.40
codegen_flags: <defaults>
</compile_context>

<pallas_src>
import functools
import math

import jax
import jax.numpy as jnp
from jax.experimental import pallas as pl
from jax.experimental.pallas import tpu as pltpu


# ---------------------------------------------------------------------------
# helpers
# ---------------------------------------------------------------------------

def _round_up(x, m):
    return ((x + m - 1) // m) * m


def _pad2d(x, rows, cols):
    r, c = x.shape
    return jnp.pad(x, ((0, rows - r), (0, cols - c)))


def _vmem_budget_bytes():
    """Generation-aware VMEM budget (~0.7x per-core capacity)."""
    cap = 64 << 20                      # conservative fallback = v7x per-TC VMEM
    try:
        info = pltpu.get_tpu_info()
        cap = int(getattr(info, "vmem_capacity_bytes", cap) or cap)
    except Exception:
        pass
    return int(cap * 0.7)


def _fused_vmem_bytes(n_pad, dp, num_layers, compute_dtype):
    """VMEM footprint estimate for the fully-fused path (no grid => single
    buffering), including the f32 xw / h intermediates inside the kernel."""
    cb = jnp.dtype(compute_dtype).itemsize
    n_scratch = min(max(num_layers - 1, 0), 2)
    a_b = n_pad * n_pad * cb
    x_b = n_pad * dp * cb
    w_b = num_layers * dp * dp * cb
    b_b = num_layers * dp * 4
    o_b = n_pad * dp * 4
    s_b = n_scratch * n_pad * dp * cb
    inter_b = 2 * n_pad * dp * 4
    return a_b + x_b + w_b + b_b + o_b + s_b + inter_b


# ---------------------------------------------------------------------------
# fused path: one pallas_call for the entire num_layers-deep GCN
# ---------------------------------------------------------------------------

def gcn_fused_kernel(a_ref, x_ref, w_ref, b_ref, o_ref, *scratch, num_layers):
    """All layers fused: A_norm / weights resident, H ping-pongs in VMEM
    scratch (compute dtype); accumulation is always f32."""
    cdt = x_ref.dtype
    for layer in range(num_layers):          # static Python unroll (L is small)
        src = x_ref[...] if layer == 0 else scratch[(layer - 1) % 2][...]
        xw = jnp.dot(src, w_ref[layer], preferred_element_type=jnp.float32)
        h = jnp.dot(a_ref[...], xw.astype(cdt),
                    preferred_element_type=jnp.float32)
        h = h + b_ref[layer]
        if layer != num_layers - 1:
            h = jnp.maximum(h, 0.0)
            scratch[layer % 2][...] = h.astype(cdt)
        else:
            o_ref[...] = h.astype(o_ref.dtype)


def gcn_fused(a_pad, x_pad, w_stack, b_stack, *, num_layers, vmem_limit_bytes):
    n_pad, dp = x_pad.shape
    cdt = x_pad.dtype
    n_scratch = min(max(num_layers - 1, 0), 2)
    kernel = functools.partial(gcn_fused_kernel, num_layers=num_layers)
    return pl.pallas_call(
        kernel,
        out_shape=jax.ShapeDtypeStruct((n_pad, dp), jnp.float32),
        # No grid: every array is a single full-extent VMEM block.
        in_specs=[
            pl.BlockSpec(a_pad.shape, lambda: (0, 0)),
            pl.BlockSpec(x_pad.shape, lambda: (0, 0)),
            pl.BlockSpec(w_stack.shape, lambda: (0, 0, 0)),
            pl.BlockSpec(b_stack.shape, lambda: (0, 0, 0)),
        ],
        out_specs=pl.BlockSpec((n_pad, dp), lambda: (0, 0)),
        scratch_shapes=[pltpu.VMEM((n_pad, dp), cdt) for _ in range(n_scratch)],
        compiler_params=pltpu.CompilerParams(
            vmem_limit_bytes=int(vmem_limit_bytes)),
    )(a_pad, x_pad, w_stack, b_stack)


# ---------------------------------------------------------------------------
# tiled per-layer path (graphs too big for the fused VMEM-resident path)
# ---------------------------------------------------------------------------

def _xw_kernel(x_ref, w_ref, y_ref):
    y_ref[...] = jnp.dot(x_ref[...], w_ref[...],
                         preferred_element_type=jnp.float32).astype(y_ref.dtype)


def _agg_resident_kernel(a_ref, y_ref, b_ref, o_ref, *, apply_relu):
    """A tiled (tm, tk); Y fully resident in VMEM and sliced along k."""
    k = pl.program_id(1)
    tk = a_ref.shape[1]

    @pl.when(k == 0)
    def _():
        o_ref[...] = jnp.zeros_like(o_ref)

    start = pl.multiple_of(k * tk, tk)
    o_ref[...] += jnp.dot(a_ref[...], y_ref[pl.ds(start, tk), :],
                          preferred_element_type=jnp.float32)

    @pl.when(k == pl.num_programs(1) - 1)
    def _():
        h = o_ref[...] + b_ref[...]
        if apply_relu:
            h = jnp.maximum(h, 0.0)
        o_ref[...] = h


def _agg_streamed_kernel(a_ref, y_ref, b_ref, o_ref, *, apply_relu):
    """Fallback: Y streamed per k tile (used only when Y doesn't fit VMEM)."""
    @pl.when(pl.program_id(1) == 0)
    def _():
        o_ref[...] = jnp.zeros_like(o_ref)

    o_ref[...] += jnp.dot(a_ref[...], y_ref[...],
                          preferred_element_type=jnp.float32)

    @pl.when(pl.program_id(1) == pl.num_programs(1) - 1)
    def _():
        h = o_ref[...] + b_ref[...]
        if apply_relu:
            h = jnp.maximum(h, 0.0)
        o_ref[...] = h


def gcn_layer_tiled(a_cast, x_pad, w_pad, b_pad, *, apply_relu, tm, tk,
                    compute_dtype, y_resident, vmem_budget):
    """One GraphConv layer: Y = X@W once (row-tiled), then H = A@Y + b with a
    ("parallel", "arbitrary") grid accumulating directly into the f32 output."""
    n_pad, fin = x_pad.shape
    fout = w_pad.shape[1]
    cb = jnp.dtype(compute_dtype).itemsize

    # Step 1: Y = X @ W (row-tiled, lane-dense output, cast to compute dtype).
    y = pl.pallas_call(
        _xw_kernel,
        out_shape=jax.ShapeDtypeStruct((n_pad, fout), compute_dtype),
        grid_spec=pltpu.PrefetchScalarGridSpec(
            num_scalar_prefetch=0,
            grid=(n_pad // tm,),
            in_specs=[pl.BlockSpec((tm, fin), lambda i: (i, 0)),
                      pl.BlockSpec((fin, fout), lambda i: (0, 0))],
            out_specs=pl.BlockSpec((tm, fout), lambda i: (i, 0))),
        compiler_params=pltpu.CompilerParams(
            dimension_semantics=("parallel",)),
    )(x_pad, w_pad)

    # Decide whether Y can stay resident in VMEM (count 2x for double buffers).
    if y_resident == "auto":
        foot = (2 * tm * tk * cb            # A tiles
                + 2 * n_pad * fout * cb     # resident Y
                + 2 * fout * 4              # bias
                + 2 * tm * fout * 4)        # f32 output tile
        y_resident = foot <= vmem_budget

    # Step 2: H = A_norm @ Y + b.
    if y_resident:
        kernel = functools.partial(_agg_resident_kernel, apply_relu=apply_relu)
        y_spec = pl.BlockSpec((n_pad, fout), lambda i, k: (0, 0))   # fetched once
    else:
        kernel = functools.partial(_agg_streamed_kernel, apply_relu=apply_relu)
        y_spec = pl.BlockSpec((tk, fout), lambda i, k: (k, 0))

    return pl.pallas_call(
        kernel,
        out_shape=jax.ShapeDtypeStruct((n_pad, fout), jnp.float32),
        grid_spec=pltpu.PrefetchScalarGridSpec(
            num_scalar_prefetch=0,
            grid=(n_pad // tm, n_pad // tk),
            in_specs=[pl.BlockSpec((tm, tk), lambda i, k: (i, k)),
                      y_spec,
                      pl.BlockSpec((1, fout), lambda i, k: (0, 0))],
            out_specs=pl.BlockSpec((tm, fout), lambda i, k: (i, 0))),
        compiler_params=pltpu.CompilerParams(
            dimension_semantics=("parallel", "arbitrary"),
            vmem_limit_bytes=int(vmem_budget)),
    )(a_cast, y, b_pad)


# ---------------------------------------------------------------------------
# forward wrapper
# ---------------------------------------------------------------------------

@functools.partial(jax.jit,
                   static_argnames=("path", "compute_dtype", "tm", "tk",
                                    "y_resident"))
def gnn_forward(a_norm, feat, weights, biases, *, path="auto",
                compute_dtype=jnp.float32, tm=256, tk=512, y_resident="auto"):
    """GNN.forward for gnn_type='gcn': ReLU between layers, none after last."""
    weights = list(weights)
    biases = list(biases)
    n, in_dim = feat.shape
    num_layers = len(weights)
    dims = [in_dim] + [w.shape[1] for w in weights]
    out_dim = dims[-1]
    dp = _round_up(max(dims + [8]), 128)      # lane-dense padded feature width
    budget = _vmem_budget_bytes()

    if path == "auto":
        fused_ok = _fused_vmem_bytes(_round_up(n, 128), dp, num_layers,
                                     compute_dtype) <= budget
        path = "fused" if fused_ok else "tiled"

    if path == "fused":
        # Single kernel, A resident; note: no grid => one TensorCore on v7x.
        n_pad = _round_up(n, 128)             # lane-dense / MXU-aligned K
        cdt = compute_dtype
        a_pad = _pad2d(a_norm, n_pad, n_pad).astype(cdt)
        x_pad = _pad2d(feat, n_pad, dp).astype(cdt)
        w_stack = jnp.stack([_pad2d(w.astype(jnp.float32), dp, dp)
                             for w in weights]).astype(cdt)
        b_stack = jnp.stack([_pad2d(b.reshape(1, -1).astype(jnp.float32), 1, dp)
                             for b in biases])
        out_pad = gcn_fused(a_pad, x_pad, w_stack, b_stack,
                            num_layers=num_layers, vmem_limit_bytes=budget)
        return out_pad[:n, :out_dim]

    # ---- tiled per-layer path ----
    tile_cap = _round_up(n, 128)
    tm = min(tm, tile_cap)
    tk = min(tk, tile_cap)
    assert tm % 128 == 0 and tk % 128 == 0
    n_pad = _round_up(n, math.lcm(tm, tk))

    # Cast/pad the n^2 adjacency ONCE (hoisted out of the layer loop).
    a_cast = _pad2d(a_norm, n_pad, n_pad).astype(compute_dtype)
    h = _pad2d(feat.astype(jnp.float32), n_pad, dp)
    for i in range(num_layers):
        w_pad = _pad2d(weights[i].astype(jnp.float32), dp, dp)
        b_pad = _pad2d(biases[i].reshape(1, -1).astype(jnp.float32), 1, dp)
        last = (i == num_layers - 1)
        h = gcn_layer_tiled(a_cast, h, w_pad, b_pad, apply_relu=not last,
                            tm=tm, tk=tk, compute_dtype=compute_dtype,
                            y_resident=y_resident, vmem_budget=budget)
    return h[:n, :out_dim]


def gnn_forward_ref(a_norm, feat, weights, biases):
    """Pure-JAX reference for correctness checking."""
    h = feat
    for i in range(len(weights)):
        h = a_norm @ (h @ weights[i]) + biases[i]
        if i != len(weights) - 1:
            h = jax.nn.relu(h)
    return h


# ---------------------------------------------------------------------------
# deterministic inputs
# ---------------------------------------------------------------------------

def build_params(key, input_dim, hidden_dim, output_dim, num_layers):
    """Xavier-uniform-ish init matching GraphConv parameter shapes."""
    dims = [input_dim] + [hidden_dim] * (num_layers - 1) + [output_dim]
    weights, biases = [], []
    for i in range(num_layers):
        key, wk, bk = jax.random.split(key, 3)
        fan_in, fan_out = dims[i], dims[i + 1]
        limit = (6.0 / (fan_in + fan_out)) ** 0.5
        w = jax.random.uniform(wk, (fan_in, fan_out), jnp.float32, -limit, limit)
        b = jax.random.uniform(bk, (fan_out,), jnp.float32, -0.1, 0.1)
        weights.append(w)
        biases.append(b)
    return weights, biases


def build_graph(key, num_nodes):
    """Random undirected graph -> dense normalized adjacency (DGL norm='both')."""
    key, ak = jax.random.split(key)
    a = (jax.random.uniform(ak, (num_nodes, num_nodes)) < 0.15).astype(jnp.float32)
    a = jnp.maximum(a, a.T)                      # symmetrize
    a = a * (1.0 - jnp.eye(num_nodes))           # no self-loops (GraphConv default)
    deg = jnp.clip(a.sum(axis=1), 1.0, None)     # degree clamp, as in DGL
    d_inv_sqrt = 1.0 / jnp.sqrt(deg)
    return a * d_inv_sqrt[:, None] * d_inv_sqrt[None, :]


if __name__ == "__main__":
    input_dim, hidden_dim, output_dim, num_layers = 16, 32, 8, 3

    key = jax.random.PRNGKey(0)
    key, gk, fk, pk = jax.random.split(key, 4)

    # --- small graph: fully-fused single-kernel path (f32 and bf16) ---
    n_small = 64
    a_small = build_graph(gk, n_small)
    feat_small = jax.random.normal(fk, (n_small, input_dim), jnp.float32)
    weights, biases = build_params(pk, input_dim, hidden_dim, output_dim,
                                   num_layers)
    ref_small = gnn_forward_ref(a_small, feat_small, weights, biases)

    out = jax.block_until_ready(
        gnn_forward(a_small, feat_small, weights, biases))      # auto -> fused f32
    assert out.shape == (n_small, output_dim)
    assert jnp.allclose(out, ref_small, atol=1e-4, rtol=1e-4)

    out_fbf = jax.block_until_ready(
        gnn_forward(a_small, feat_small, weights, biases,
                    path="fused", compute_dtype=jnp.bfloat16))   # bf16-resident A
    assert jnp.allclose(out_fbf, ref_small, atol=2e-1, rtol=2e-1)

    # --- larger graph: row-tiled per-layer path ---
    key, gk2, fk2 = jax.random.split(key, 3)
    n_big = 512
    a_big = build_graph(gk2, n_big)
    feat_big = jax.random.normal(fk2, (n_big, input_dim), jnp.float32)
    ref_big = gnn_forward_ref(a_big, feat_big, weights, biases)

    # f32, Y resident in VMEM (auto), 256x256 aggregation tiles.
    out_t = jax.block_until_ready(
        gnn_forward(a_big, feat_big, weights, biases,
                    path="tiled", tm=256, tk=256))
    assert out_t.shape == (n_big, output_dim)
    assert jnp.allclose(out_t, ref_big, atol=5e-4, rtol=5e-4)

    # f32, forced Y-streamed fallback (covers the k-tiled aggregation kernel).
    out_s = jax.block_until_ready(
        gnn_forward(a_big, feat_big, weights, biases,
                    path="tiled", tm=128, tk=128, y_resident=False))
    assert jnp.allclose(out_s, ref_big, atol=5e-4, rtol=5e-4)

    # bf16 adjacency / Y with f32 accumulation (v6e/v7x MXU path); loose check.
    out_bf = jax.block_until_ready(
        gnn_forward(a_big, feat_big, weights, biases,
                    path="tiled", compute_dtype=jnp.bfloat16, tm=256, tk=256))
    assert jnp.allclose(out_bf, ref_big, atol=1e-1, rtol=1e-1)

    # TODO(synk): 'sage' and 'gat' gnn_type variants (SAGEConv / GATConv with
    # per-head edge-softmax attention) are not implemented; only the 'gcn'
    # GraphConv path is reproduced (DGL graph object replaced by a dense
    # symmetrically-normalized adjacency).
    print("KERNEL_OK")
</pallas_src>

<mosaic_0001>
module attributes {stable_mosaic.version = 11 : i64} {
  func.func @gcn_fused_kernel(%arg0: memref<128x128xf32, #tpu.memory_space<vmem>>, %arg1: memref<128x128xf32, #tpu.memory_space<vmem>>, %arg2: memref<3x128x128xf32, #tpu.memory_space<vmem>>, %arg3: memref<3x1x128xf32, #tpu.memory_space<vmem>>, %arg4: memref<128x128xf32, #tpu.memory_space<vmem>>, %arg5: memref<128x128xf32, #tpu.memory_space<vmem>>, %arg6: memref<128x128xf32, #tpu.memory_space<vmem>>) attributes {dimension_semantics = [], scalar_prefetch = 0 : i64, scratch_operands = 2 : i64, tpu.core_type = #tpu.core_type<tc>} {
    %c0 = arith.constant 0 : index
    %c0_0 = arith.constant 0 : index
    %0 = vector.load %arg1[%c0, %c0_0] : memref<128x128xf32, #tpu.memory_space<vmem>>, vector<128x128xf32>
    %c0_1 = arith.constant 0 : index
    %c0_2 = arith.constant 0 : index
    %c0_3 = arith.constant 0 : index
    %1 = vector.load %arg2[%c0_1, %c0_2, %c0_3] : memref<3x128x128xf32, #tpu.memory_space<vmem>>, vector<1x128x128xf32>
    %2 = vector.shape_cast %1 : vector<1x128x128xf32> to vector<128x128xf32>
    %cst = arith.constant dense<0.000000e+00> : vector<128x128xf32>
    %3 = tpu.matmul %0, %2, %cst {dimension_numbers = #tpu.dot_dimension_numbers<[1], [0], [0], [1], [0, 0, 1, 1], [], []>} : vector<128x128xf32>, vector<128x128xf32>, vector<128x128xf32> -> vector<128x128xf32>
    %c0_4 = arith.constant 0 : index
    %c0_5 = arith.constant 0 : index
    %4 = vector.load %arg0[%c0_4, %c0_5] : memref<128x128xf32, #tpu.memory_space<vmem>>, vector<128x128xf32>
    %cst_6 = arith.constant dense<0.000000e+00> : vector<128x128xf32>
    %5 = tpu.matmul %4, %3, %cst_6 {dimension_numbers = #tpu.dot_dimension_numbers<[1], [0], [0], [1], [0, 0, 1, 1], [], []>} : vector<128x128xf32>, vector<128x128xf32>, vector<128x128xf32> -> vector<128x128xf32>
    %c0_7 = arith.constant 0 : index
    %c0_8 = arith.constant 0 : index
    %c0_9 = arith.constant 0 : index
    %6 = vector.load %arg3[%c0_7, %c0_8, %c0_9] : memref<3x1x128xf32, #tpu.memory_space<vmem>>, vector<1x1x128xf32>
    %7 = vector.shape_cast %6 : vector<1x1x128xf32> to vector<1x128xf32>
    %8 = vector.broadcast %7 : vector<1x128xf32> to vector<128x128xf32>
    %9 = arith.addf %5, %8 : vector<128x128xf32>
    %cst_10 = arith.constant 0.000000e+00 : f32
    %10 = vector.broadcast %cst_10 : f32 to vector<128x128xf32>
    %11 = arith.maximumf %9, %10 : vector<128x128xf32>
    %c0_11 = arith.constant 0 : index
    %c0_12 = arith.constant 0 : index
    %12 = vector.load %arg5[%c0_11, %c0_12] : memref<128x128xf32, #tpu.memory_space<vmem>>, vector<128x128xf32>
    tpu.vector_store %arg5[%c0_11, %c0_12], %11 {strides = array<i32>} : memref<128x128xf32, #tpu.memory_space<vmem>>, vector<128x128xf32>,
    %c0_13 = arith.constant 0 : index
    %c0_14 = arith.constant 0 : index
    %13 = vector.load %arg5[%c0_13, %c0_14] : memref<128x128xf32, #tpu.memory_space<vmem>>, vector<128x128xf32>
    %c1 = arith.constant 1 : index
    %c0_15 = arith.constant 0 : index
    %c0_16 = arith.constant 0 : index
    %14 = vector.load %arg2[%c1, %c0_15, %c0_16] : memref<3x128x128xf32, #tpu.memory_space<vmem>>, vector<1x128x128xf32>
    %15 = vector.shape_cast %14 : vector<1x128x128xf32> to vector<128x128xf32>
    %cst_17 = arith.constant dense<0.000000e+00> : vector<128x128xf32>
    %16 = tpu.matmul %13, %15, %cst_17 {dimension_numbers = #tpu.dot_dimension_numbers<[1], [0], [0], [1], [0, 0, 1, 1], [], []>} : vector<128x128xf32>, vector<128x128xf32>, vector<128x128xf32> -> vector<128x128xf32>
    %c0_18 = arith.constant 0 : index
    %c0_19 = arith.constant 0 : index
    %17 = vector.load %arg0[%c0_18, %c0_19] : memref<128x128xf32, #tpu.memory_space<vmem>>, vector<128x128xf32>
    %cst_20 = arith.constant dense<0.000000e+00> : vector<128x128xf32>
    %18 = tpu.matmul %17, %16, %cst_20 {dimension_numbers = #tpu.dot_dimension_numbers<[1], [0], [0], [1], [0, 0, 1, 1], [], []>} : vector<128x128xf32>, vector<128x128xf32>, vector<128x128xf32> -> vector<128x128xf32>
    %c1_21 = arith.constant 1 : index
    %c0_22 = arith.constant 0 : index
    %c0_23 = arith.constant 0 : index
    %19 = vector.load %arg3[%c1_21, %c0_22, %c0_23] : memref<3x1x128xf32, #tpu.memory_space<vmem>>, vector<1x1x128xf32>
    %20 = vector.shape_cast %19 : vector<1x1x128xf32> to vector<1x128xf32>
    %21 = vector.broadcast %20 : vector<1x128xf32> to vector<128x128xf32>
    %22 = arith.addf %18, %21 : vector<128x128xf32>
    %cst_24 = arith.constant 0.000000e+00 : f32
    %23 = vector.broadcast %cst_24 : f32 to vector<128x128xf32>
    %24 = arith.maximumf %22, %23 : vector<128x128xf32>
    %c0_25 = arith.constant 0 : index
    %c0_26 = arith.constant 0 : index
    %25 = vector.load %arg6[%c0_25, %c0_26] : memref<128x128xf32, #tpu.memory_space<vmem>>, vector<128x128xf32>
    tpu.vector_store %arg6[%c0_25, %c0_26], %24 {strides = array<i32>} : memref<128x128xf32, #tpu.memory_space<vmem>>, vector<128x128xf32>,
    %c0_27 = arith.constant 0 : index
    %c0_28 = arith.constant 0 : index
    %26 = vector.load %arg6[%c0_27, %c0_28] : memref<128x128xf32, #tpu.memory_space<vmem>>, vector<128x128xf32>
    %c2 = arith.constant 2 : index
    %c0_29 = arith.constant 0 : index
    %c0_30 = arith.constant 0 : index
    %27 = vector.load %arg2[%c2, %c0_29, %c0_30] : memref<3x128x128xf32, #tpu.memory_space<vmem>>, vector<1x128x128xf32>
    %28 = vector.shape_cast %27 : vector<1x128x128xf32> to vector<128x128xf32>
    %cst_31 = arith.constant dense<0.000000e+00> : vector<128x128xf32>
    %29 = tpu.matmul %26, %28, %cst_31 {dimension_numbers = #tpu.dot_dimension_numbers<[1], [0], [0], [1], [0, 0, 1, 1], [], []>} : vector<128x128xf32>, vector<128x128xf32>, vector<128x128xf32> -> vector<128x128xf32>
    %c0_32 = arith.constant 0 : index
    %c0_33 = arith.constant 0 : index
    %30 = vector.load %arg0[%c0_32, %c0_33] : memref<128x128xf32, #tpu.memory_space<vmem>>, vector<128x128xf32>
    %cst_34 = arith.constant dense<0.000000e+00> : vector<128x128xf32>
    %31 = tpu.matmul %30, %29, %cst_34 {dimension_numbers = #tpu.dot_dimension_numbers<[1], [0], [0], [1], [0, 0, 1, 1], [], []>} : vector<128x128xf32>, vector<128x128xf32>, vector<128x128xf32> -> vector<128x128xf32>
    %c2_35 = arith.constant 2 : index
    %c0_36 = arith.constant 0 : index
    %c0_37 = arith.constant 0 : index
    %32 = vector.load %arg3[%c2_35, %c0_36, %c0_37] : memref<3x1x128xf32, #tpu.memory_space<vmem>>, vector<1x1x128xf32>
    %33 = vector.shape_cast %32 : vector<1x1x128xf32> to vector<1x128xf32>
    %34 = vector.broadcast %33 : vector<1x128xf32> to vector<128x128xf32>
    %35 = arith.addf %31, %34 : vector<128x128xf32>
    %c0_38 = arith.constant 0 : index
    %c0_39 = arith.constant 0 : index
    %36 = vector.load %arg4[%c0_38, %c0_39] : memref<128x128xf32, #tpu.memory_space<vmem>>, vector<128x128xf32>
    tpu.vector_store %arg4[%c0_38, %c0_39], %35 {strides = array<i32>} : memref<128x128xf32, #tpu.memory_space<vmem>>, vector<128x128xf32>,
    return
  }
}

</mosaic_0001>

<llo_original>
// kernel: gnn_forward.1
$region0: #{gnn_forward.1}
  #allocation0 [shape = 'u32[]', space=smem, size = 0x4, offset = 0x4, fixed_abs, tag = 'smem constant byte address 0x4 - core index']
  #allocation1 [shape = 'u32[144,128]{1,0:T(1,128)}', space=vmem, size = 0x12000, scoped, tag = 'internal scratch']
  #allocation2 [shape = 'f32[128,128]{1,0:T(8,128)}', space=vmem, size = 0x10000, scoped, tag = 'scratch operand']
  #allocation3 [shape = 'f32[128,128]{1,0:T(8,128)}', space=vmem, size = 0x10000, scoped, tag = 'scratch operand']
  %s0 = inlined_call_operand.vmem [shape: f32[128,128], index: 0, kind: input, shape index: {}]
  %s1 = inlined_call_operand.vmem [shape: f32[128,128], index: 1, kind: input, shape index: {}]
  %s2 = inlined_call_operand.vmem [shape: f32[3,128,128], index: 2, kind: input, shape index: {}]
  %s3 = inlined_call_operand.vmem [shape: f32[3,1,128], index: 3, kind: input, shape index: {}]
  %s4 = inlined_call_operand.vmem [shape: f32[128,128], index: 4, kind: output, shape index: {}]
  %s5 = sld [smem:[#allocation0]]
  $region26: #{gnn_forward.1} parent=0
    _
  %s7 = ssub.s32 1, %s5
  %s8 = scalar_select 0, %s7, %s5
  // Predicated region
  $region2: #{gnn_forward.1} parent=0 // pred_check
    _
  $region3: #{gnn_forward.1} parent=0 // pred_check_branch
    %10 = sbr.rel (0) target = $region5
  $region4: #{gnn_forward.1} parent=0 // pred_region
    _
  $region5: #{gnn_forward.1} parent=0 // pred_fallthru
    _
  // Predicated region
  $region6: #{gnn_forward.1} parent=0 // pred_check
    _
  $region7: #{gnn_forward.1} parent=0 // pred_check_branch
    %12 = sbr.rel (0) target = $region9
  $region8: #{gnn_forward.1} parent=0 // pred_region
    _
  $region9: #{gnn_forward.1} parent=0 // pred_fallthru
    _
  // Predicated region
  $region10: #{gnn_forward.1} parent=0 // pred_check
    _
  $region11: #{gnn_forward.1} parent=0 // pred_check_branch
    %14 = sbr.rel (0) target = $region13
  $region12: #{gnn_forward.1} parent=0 // pred_region
    _
  $region13: #{gnn_forward.1} parent=0 // pred_fallthru
    _
  // Predicated region
  $region14: #{gnn_forward.1} parent=0 // pred_check
    _
  $region15: #{gnn_forward.1} parent=0 // pred_check_branch
    %16 = sbr.rel (0) target = $region17
  $region16: #{gnn_forward.1} parent=0 // pred_region
    _
  $region17: #{gnn_forward.1} parent=0 // pred_fallthru
    _
  %v17 = vld [vmem:[%s1] sm:$0xff]
  %v18 = vld [vmem:[%s1 + $0x8] sm:$0xff]
  %v19 = vld [vmem:[%s1 + $0x10] sm:$0xff]
  %v20 = vld [vmem:[%s1 + $0x18] sm:$0xff]
  %v21 = vld [vmem:[%s1 + $0x20] sm:$0xff]
  %v22 = vld [vmem:[%s1 + $0x28] sm:$0xff]
  %v23 = vld [vmem:[%s1 + $0x30] sm:$0xff]
  %v24 = vld [vmem:[%s1 + $0x38] sm:$0xff]
  %v25 = vld [vmem:[%s1 + $0x40] sm:$0xff]
  %v26 = vld [vmem:[%s1 + $0x48] sm:$0xff]
  %v27 = vld [vmem:[%s1 + $0x50] sm:$0xff]
  %v28 = vld [vmem:[%s1 + $0x58] sm:$0xff]
  %v29 = vld [vmem:[%s1 + $0x60] sm:$0xff]
  %v30 = vld [vmem:[%s1 + $0x68] sm:$0xff]
  %v31 = vld [vmem:[%s1 + $0x70] sm:$0xff]
  %v32 = vld [vmem:[%s1 + $0x78] sm:$0xff]
  %v33 = vld [vmem:[%s2] sm:$0xff]
  %v34 = vld [vmem:[%s2 + $0x8] sm:$0xff]
  %v35 = vld [vmem:[%s2 + $0x10] sm:$0xff]
  %v36 = vld [vmem:[%s2 + $0x18] sm:$0xff]
  %v37 = vld [vmem:[%s2 + $0x20] sm:$0xff]
  %v38 = vld [vmem:[%s2 + $0x28] sm:$0xff]
  %v39 = vld [vmem:[%s2 + $0x30] sm:$0xff]
  %v40 = vld [vmem:[%s2 + $0x38] sm:$0xff]
  %v41 = vld [vmem:[%s2 + $0x40] sm:$0xff]
  %v42 = vld [vmem:[%s2 + $0x48] sm:$0xff]
  %v43 = vld [vmem:[%s2 + $0x50] sm:$0xff]
  %v44 = vld [vmem:[%s2 + $0x58] sm:$0xff]
  %v45 = vld [vmem:[%s2 + $0x60] sm:$0xff]
  %v46 = vld [vmem:[%s2 + $0x68] sm:$0xff]
  %v47 = vld [vmem:[%s2 + $0x70] sm:$0xff]
  %v48 = vld [vmem:[%s2 + $0x78] sm:$0xff]
  %49 = vmatprep.subr.mxu0 0.0
  %50 = vmatpush1.msra.mxu0 %v33
  %51 = vmatprep.subr.mxu0 0.0
  %52 = vmatpush1.msra.mxu0 %v34
  %53 = vmatprep.subr.mxu0 0.0
  %54 = vmatpush1.msra.mxu0 %v35
  %55 = vmatprep.subr.mxu0 0.0
  %56 = vmatpush1.msra.mxu0 %v36
  %57 = vmatprep.subr.mxu0 0.0
  %58 = vmatpush1.msra.mxu0 %v37
  %59 = vmatprep.subr.mxu0 0.0
  %60 = vmatpush1.msra.mxu0 %v38
  %61 = vmatprep.subr.mxu0 0.0
  %62 = vmatpush1.msra.mxu0 %v39
  %63 = vmatprep.subr.mxu0 0.0
  %64 = vmatpush1.msra.mxu0 %v40
  %65 = vmatprep.subr.mxu0 0.0
  %66 = vmatpush1.msra.mxu0 %v41
  %67 = vmatprep.subr.mxu0 0.0
  %68 = vmatpush1.msra.mxu0 %v42
  %69 = vmatprep.subr.mxu0 0.0
  %70 = vmatpush1.msra.mxu0 %v43
  %71 = vmatprep.subr.mxu0 0.0
  %72 = vmatpush1.msra.mxu0 %v44
  %73 = vmatprep.subr.mxu0 0.0
  %74 = vmatpush1.msra.mxu0 %v45
  %75 = vmatprep.subr.mxu0 0.0
  %76 = vmatpush1.msra.mxu0 %v46
  %77 = vmatprep.subr.mxu0 0.0
  %78 = vmatpush1.msra.mxu0 %v47
  %79 = vmatprep.subr.mxu0 0.0
  %80 = vmatpush1.msra.mxu0 %v48
  %81 = vmatprep.subr.mxu0 0.0
  %82 = vmatpush1.msra.mxu0 0.0
  %83 = vmatprep.subr.mxu0 0.0
  %84 = vmatpush1.msra.mxu0 0.0
  %85 = vmatprep.subr.mxu0 0.0
  %86 = vmatpush1.msra.mxu0 0.0
  %87 = vmatprep.subr.mxu0 0.0
  %88 = vmatpush1.msra.mxu0 0.0
  %89 = vmatprep.subr.mxu0 0.0
  %90 = vmatpush1.msra.mxu0 0.0
  %91 = vmatprep.subr.mxu0 0.0
  %92 = vmatpush1.msra.mxu0 0.0
  %93 = vmatprep.subr.mxu0 0.0
  %94 = vmatpush1.msra.mxu0 0.0
  %95 = vmatprep.subr.mxu0 0.0
  %96 = vmatpush1.msra.mxu0 0.0
  %97 = vmatprep.subr.mxu0 0.0
  %98 = vmatpush1.msra.mxu0 0.0
  %99 = vmatprep.subr.mxu0 0.0
  %100 = vmatpush1.msra.mxu0 0.0
  %101 = vmatprep.subr.mxu0 0.0
  %102 = vmatpush1.msra.mxu0 0.0
  %103 = vmatprep.subr.mxu0 0.0
  %104 = vmatpush1.msra.mxu0 0.0
  %105 = vmatprep.subr.mxu0 0.0
  %106 = vmatpush1.msra.mxu0 0.0
  %107 = vmatprep.subr.mxu0 0.0
  %108 = vmatpush1.msra.mxu0 0.0
  %109 = vmatprep.subr.mxu0 0.0
  %110 = vmatpush1.msra.mxu0 0.0
  %111 = vmatprep.subr.mxu0 0.0
  %112 = vmatpush1.msra.mxu0 0.0
  %113 = vmatprep.mubr.f32.mxu0 0.0
  %114 = vmatmul.mubr.f32.gmra.mrb[0].mxu0 %v17
  %v115 = vpop.f32.mrb[0].mxu0
  %v116 = vadd.f32 0.0, %v115
  %v117 = vpop.f32.mrb[0].mxu0
  %118 = vmatprep.mubr.f32.mxu0 0.0
  %119 = vmatmul.mubr.f32.gmra.mrb[0].mxu0 %v18
  %v120 = vpop.f32.mrb[0].mxu0
  %v121 = vadd.f32 0.0, %v120
  %v122 = vpop.f32.mrb[0].mxu0
  %123 = vmatprep.mubr.f32.mxu0 0.0
  %124 = vmatmul.mubr.f32.gmra.mrb[0].mxu0 %v19
  %v125 = vpop.f32.mrb[0].mxu0
  %v126 = vadd.f32 0.0, %v125
  %v127 = vpop.f32.mrb[0].mxu0
  %128 = vmatprep.mubr.f32.mxu0 0.0
  %129 = vmatmul.mubr.f32.gmra.mrb[0].mxu0 %v20
  %v130 = vpop.f32.mrb[0].mxu0
  %v131 = vadd.f32 0.0, %v130
  %v132 = vpop.f32.mrb[0].mxu0
  %133 = vmatprep.mubr.f32.mxu0 0.0
  %134 = vmatmul.mubr.f32.gmra.mrb[0].mxu0 %v21
  %v135 = vpop.f32.mrb[0].mxu0
  %v136 = vadd.f32 0.0, %v135
  %v137 = vpop.f32.mrb[0].mxu0
  %138 = vmatprep.mubr.f32.mxu0 0.0
  %139 = vmatmul.mubr.f32.gmra.mrb[0].mxu0 %v22
  %v140 = vpop.f32.mrb[0].mxu0
  %v141 = vadd.f32 0.0, %v140
  %v142 = vpop.f32.mrb[0].mxu0
  %143 = vmatprep.mubr.f32.mxu0 0.0
  %144 = vmatmul.mubr.f32.gmra.mrb[0].mxu0 %v23
  %v145 = vpop.f32.mrb[0].mxu0
  %v146 = vadd.f32 0.0, %v145
  %v147 = vpop.f32.mrb[0].mxu0
  %148 = vmatprep.mubr.f32.mxu0 0.0
  %149 = vmatmul.mubr.f32.gmra.mrb[0].mxu0 %v24
  %v150 = vpop.f32.mrb[0].mxu0
  %v151 = vadd.f32 0.0, %v150
  %v152 = vpop.f32.mrb[0].mxu0
  %153 = vmatprep.mubr.f32.mxu0 0.0
  %154 = vmatmul.mubr.f32.gmra.mrb[0].mxu0 %v25
  %v155 = vpop.f32.mrb[0].mxu0
  %v156 = vadd.f32 0.0, %v155
  %v157 = vpop.f32.mrb[0].mxu0
  %158 = vmatprep.mubr.f32.mxu0 0.0
  %159 = vmatmul.mubr.f32.gmra.mrb[0].mxu0 %v26
  %v160 = vpop.f32.mrb[0].mxu0
  %v161 = vadd.f32 0.0, %v160
  %v162 = vpop.f32.mrb[0].mxu0
  %163 = vmatprep.mubr.f32.mxu0 0.0
  %164 = vmatmul.mubr.f32.gmra.mrb[0].mxu0 %v27
  %v165 = vpop.f32.mrb[0].mxu0
  %v166 = vadd.f32 0.0, %v165
  %v167 = vpop.f32.mrb[0].mxu0
  %168 = vmatprep.mubr.f32.mxu0 0.0
  %169 = vmatmul.mubr.f32.gmra.mrb[0].mxu0 %v28
  %v170 = vpop.f32.mrb[0].mxu0
  %v171 = vadd.f32 0.0, %v170
  %v172 = vpop.f32.mrb[0].mxu0
  %173 = vmatprep.mubr.f32.mxu0 0.0
  %174 = vmatmul.mubr.f32.gmra.mrb[0].mxu0 %v29
  %v175 = vpop.f32.mrb[0].mxu0
  %v176 = vadd.f32 0.0, %v175
  %v177 = vpop.f32.mrb[0].mxu0
  %178 = vmatprep.mubr.f32.mxu0 0.0
  %179 = vmatmul.mubr.f32.gmra.mrb[0].mxu0 %v30
  %v180 = vpop.f32.mrb[0].mxu0
  %v181 = vadd.f32 0.0, %v180
  %v182 = vpop.f32.mrb[0].mxu0
  %183 = vmatprep.mubr.f32.mxu0 0.0
  %184 = vmatmul.mubr.f32.gmra.mrb[0].mxu0 %v31
  %v185 = vpop.f32.mrb[0].mxu0
  %v186 = vadd.f32 0.0, %v185
  %v187 = vpop.f32.mrb[0].mxu0
  %188 = vmatprep.mubr.f32.mxu0 0.0
  %189 = vmatmul.mubr.f32.gmra.mrb[0].mxu0 %v32
  %v190 = vpop.f32.mrb[0].mxu0
  %v191 = vadd.f32 0.0, %v190
  %v192 = vpop.f32.mrb[0].mxu0
  %193 = vdwg.mxu0
  %v194 = vld [vmem:[%s0] sm:$0xff]
  %v195 = vld [vmem:[%s0 + $0x8] sm:$0xff]
  %v196 = vld [vmem:[%s0 + $0x10] sm:$0xff]
  %v197 = vld [vmem:[%s0 + $0x18] sm:$0xff]
  %v198 = vld [vmem:[%s0 + $0x20] sm:$0xff]
  %v199 = vld [vmem:[%s0 + $0x28] sm:$0xff]
  %v200 = vld [vmem:[%s0 + $0x30] sm:$0xff]
  %v201 = vld [vmem:[%s0 + $0x38] sm:$0xff]
  %v202 = vld [vmem:[%s0 + $0x40] sm:$0xff]
  %v203 = vld [vmem:[%s0 + $0x48] sm:$0xff]
  %v204 = vld [vmem:[%s0 + $0x50] sm:$0xff]
  %v205 = vld [vmem:[%s0 + $0x58] sm:$0xff]
  %v206 = vld [vmem:[%s0 + $0x60] sm:$0xff]
  %v207 = vld [vmem:[%s0 + $0x68] sm:$0xff]
  %v208 = vld [vmem:[%s0 + $0x70] sm:$0xff]
  %v209 = vld [vmem:[%s0 + $0x78] sm:$0xff]
  %v210 = vld [vmem:[%s3] sm:$0x1]
  %v212 = vlaneseq
  %v213 = vshrl.u32 %v212, 7
  %v214 = vsub.s32 0, %v213
  %v215 = vrot.slane %v210, %v214
  %217 = vmatprep.subr.mxu0 0.0
  %218 = vmatpush1.msra.mxu0 %v116
  %219 = vmatprep.subr.mxu0 0.0
  %220 = vmatpush1.msra.mxu0 %v121
  %221 = vmatprep.subr.mxu0 0.0
  %222 = vmatpush1.msra.mxu0 %v126
  %223 = vmatprep.subr.mxu0 0.0
  %224 = vmatpush1.msra.mxu0 %v131
  %225 = vmatprep.subr.mxu0 0.0
  %226 = vmatpush1.msra.mxu0 %v136
  %227 = vmatprep.subr.mxu0 0.0
  %228 = vmatpush1.msra.mxu0 %v141
  %229 = vmatprep.subr.mxu0 0.0
  %230 = vmatpush1.msra.mxu0 %v146
  %231 = vmatprep.subr.mxu0 0.0
  %232 = vmatpush1.msra.mxu0 %v151
  %233 = vmatprep.subr.mxu0 0.0
  %234 = vmatpush1.msra.mxu0 %v156
  %235 = vmatprep.subr.mxu0 0.0
  %236 = vmatpush1.msra.mxu0 %v161
  %237 = vmatprep.subr.mxu0 0.0
  %238 = vmatpush1.msra.mxu0 %v166
  %239 = vmatprep.subr.mxu0 0.0
  %240 = vmatpush1.msra.mxu0 %v171
  %241 = vmatprep.subr.mxu0 0.0
  %242 = vmatpush1.msra.mxu0 %v176
  %243 = vmatprep.subr.mxu0 0.0
  %244 = vmatpush1.msra.mxu0 %v181
  %245 = vmatprep.subr.mxu0 0.0
  %246 = vmatpush1.msra.mxu0 %v186
  %247 = vmatprep.subr.mxu0 0.0
  %248 = vmatpush1.msra.mxu0 %v191
  %249 = vmatprep.subr.mxu0 0.0
  %250 = vmatpush1.msra.mxu0 0.0
  %251 = vmatprep.subr.mxu0 0.0
  %252 = vmatpush1.msra.mxu0 0.0
  %253 = vmatprep.subr.mxu0 0.0
  %254 = vmatpush1.msra.mxu0 0.0
  %255 = vmatprep.subr.mxu0 0.0
  %256 = vmatpush1.msra.mxu0 0.0
  %257 = vmatprep.subr.mxu0 0.0
  %258 = vmatpush1.msra.mxu0 0.0
  %259 = vmatprep.subr.mxu0 0.0
  %260 = vmatpush1.msra.mxu0 0.0
  %261 = vmatprep.subr.mxu0 0.0
  %262 = vmatpush1.msra.mxu0 0.0
  %263 = vmatprep.subr.mxu0 0.0
  %264 = vmatpush1.msra.mxu0 0.0
  %265 = vmatprep.subr.mxu0 0.0
  %266 = vmatpush1.msra.mxu0 0.0
  %267 = vmatprep.subr.mxu0 0.0
  %268 = vmatpush1.msra.mxu0 0.0
  %269 = vmatprep.subr.mxu0 0.0
  %270 = vmatpush1.msra.mxu0 0.0
  %271 = vmatprep.subr.mxu0 0.0
  %272 = vmatpush1.msra.mxu0 0.0
  %273 = vmatprep.subr.mxu0 0.0
  %274 = vmatpush1.msra.mxu0 0.0
  %275 = vmatprep.subr.mxu0 0.0
  %276 = vmatpush1.msra.mxu0 0.0
  %277 = vmatprep.subr.mxu0 0.0
  %278 = vmatpush1.msra.mxu0 0.0
  %279 = vmatprep.subr.mxu0 0.0
  %280 = vmatpush1.msra.mxu0 0.0
  %281 = vmatprep.mubr.f32.mxu0 0.0
  %282 = vmatmul.mubr.f32.gmra.mrb[0].mxu0 %v194
  %v283 = vpop.f32.mrb[0].mxu0
  %v284 = vadd.f32 %v215, %v283
  %v285 = vpop.f32.mrb[0].mxu0
  %286 = vmatprep.mubr.f32.mxu0 0.0
  %287 = vmatmul.mubr.f32.gmra.mrb[0].mxu0 %v195
  %v288 = vpop.f32.mrb[0].mxu0
  %v289 = vadd.f32 %v215, %v288
  %v290 = vpop.f32.mrb[0].mxu0
  %291 = vmatprep.mubr.f32.mxu0 0.0
  %292 = vmatmul.mubr.f32.gmra.mrb[0].mxu0 %v196
  %v293 = vpop.f32.mrb[0].mxu0
  %v294 = vadd.f32 %v215, %v293
  %v295 = vpop.f32.mrb[0].mxu0
  %296 = vmatprep.mubr.f32.mxu0 0.0
  %297 = vmatmul.mubr.f32.gmra.mrb[0].mxu0 %v197
  %v298 = vpop.f32.mrb[0].mxu0
  %v299 = vadd.f32 %v215, %v298
  %v300 = vpop.f32.mrb[0].mxu0
  %301 = vmatprep.mubr.f32.mxu0 0.0
  %302 = vmatmul.mubr.f32.gmra.mrb[0].mxu0 %v198
  %v303 = vpop.f32.mrb[0].mxu0
  %v304 = vadd.f32 %v215, %v303
  %v305 = vpop.f32.mrb[0].mxu0
  %306 = vmatprep.mubr.f32.mxu0 0.0
  %307 = vmatmul.mubr.f32.gmra.mrb[0].mxu0 %v199
  %v308 = vpop.f32.mrb[0].mxu0
  %v309 = vadd.f32 %v215, %v308
  %v310 = vpop.f32.mrb[0].mxu0
  %311 = vmatprep.mubr.f32.mxu0 0.0
  %312 = vmatmul.mubr.f32.gmra.mrb[0].mxu0 %v200
  %v313 = vpop.f32.mrb[0].mxu0
  %v314 = vadd.f32 %v215, %v313
  %v315 = vpop.f32.mrb[0].mxu0
  %316 = vmatprep.mubr.f32.mxu0 0.0
  %317 = vmatmul.mubr.f32.gmra.mrb[0].mxu0 %v201
  %v318 = vpop.f32.mrb[0].mxu0
  %v319 = vadd.f32 %v215, %v318
  %v320 = vpop.f32.mrb[0].mxu0
  %321 = vmatprep.mubr.f32.mxu0 0.0
  %322 = vmatmul.mubr.f32.gmra.mrb[0].mxu0 %v202
  %v323 = vpop.f32.mrb[0].mxu0
  %v324 = vadd.f32 %v215, %v323
  %v325 = vpop.f32.mrb[0].mxu0
  %326 = vmatprep.mubr.f32.mxu0 0.0
  %327 = vmatmul.mubr.f32.gmra.mrb[0].mxu0 %v203
  %v328 = vpop.f32.mrb[0].mxu0
  %v329 = vadd.f32 %v215, %v328
  %v330 = vpop.f32.mrb[0].mxu0
  %331 = vmatprep.mubr.f32.mxu0 0.0
  %332 = vmatmul.mubr.f32.gmra.mrb[0].mxu0 %v204
  %v333 = vpop.f32.mrb[0].mxu0
  %v334 = vadd.f32 %v215, %v333
  %v335 = vpop.f32.mrb[0].mxu0
  %336 = vmatprep.mubr.f32.mxu0 0.0
  %337 = vmatmul.mubr.f32.gmra.mrb[0].mxu0 %v205
  %v338 = vpop.f32.mrb[0].mxu0
  %v339 = vadd.f32 %v215, %v338
  %v340 = vpop.f32.mrb[0].mxu0
  %341 = vmatprep.mubr.f32.mxu0 0.0
  %342 = vmatmul.mubr.f32.gmra.mrb[0].mxu0 %v206
  %v343 = vpop.f32.mrb[0].mxu0
  %v344 = vadd.f32 %v215, %v343
  %v345 = vpop.f32.mrb[0].mxu0
  %346 = vmatprep.mubr.f32.mxu0 0.0
  %347 = vmatmul.mubr.f32.gmra.mrb[0].mxu0 %v207
  %v348 = vpop.f32.mrb[0].mxu0
  %v349 = vadd.f32 %v215, %v348
  %v350 = vpop.f32.mrb[0].mxu0
  %351 = vmatprep.mubr.f32.mxu0 0.0
  %352 = vmatmul.mubr.f32.gmra.mrb[0].mxu0 %v208
  %v353 = vpop.f32.mrb[0].mxu0
  %v354 = vadd.f32 %v215, %v353
  %v355 = vpop.f32.mrb[0].mxu0
  %356 = vmatprep.mubr.f32.mxu0 0.0
  %357 = vmatmul.mubr.f32.gmra.mrb[0].mxu0 %v209
  %v358 = vpop.f32.mrb[0].mxu0
  %v359 = vadd.f32 %v215, %v358
  %v360 = vpop.f32.mrb[0].mxu0
  %361 = vdwg.mxu0
  %v362 = vmax.f32 %v284, 0.0
  %v363 = vmax.f32 %v289, 0.0
  %v364 = vmax.f32 %v294, 0.0
  %v365 = vmax.f32 %v299, 0.0
  %v366 = vmax.f32 %v304, 0.0
  %v367 = vmax.f32 %v309, 0.0
  %v368 = vmax.f32 %v314, 0.0
  %v369 = vmax.f32 %v319, 0.0
  %v370 = vmax.f32 %v324, 0.0
  %v371 = vmax.f32 %v329, 0.0
  %v372 = vmax.f32 %v334, 0.0
  %v373 = vmax.f32 %v339, 0.0
  %v374 = vmax.f32 %v344, 0.0
  %v375 = vmax.f32 %v349, 0.0
  %v376 = vmax.f32 %v354, 0.0
  %v377 = vmax.f32 %v359, 0.0
  %378 = vst [vmem:[#allocation2] sm:$0xff] %v362
  %379 = vst [vmem:[#allocation2 + $0x8] sm:$0xff] %v363
  %380 = vst [vmem:[#allocation2 + $0x10] sm:$0xff] %v364
  %381 = vst [vmem:[#allocation2 + $0x18] sm:$0xff] %v365
  %382 = vst [vmem:[#allocation2 + $0x20] sm:$0xff] %v366
  %383 = vst [vmem:[#allocation2 + $0x28] sm:$0xff] %v367
  %384 = vst [vmem:[#allocation2 + $0x30] sm:$0xff] %v368
  %385 = vst [vmem:[#allocation2 + $0x38] sm:$0xff] %v369
  %386 = vst [vmem:[#allocation2 + $0x40] sm:$0xff] %v370
  %387 = vst [vmem:[#allocation2 + $0x48] sm:$0xff] %v371
  %388 = vst [vmem:[#allocation2 + $0x50] sm:$0xff] %v372
  %389 = vst [vmem:[#allocation2 + $0x58] sm:$0xff] %v373
  %390 = vst [vmem:[#allocation2 + $0x60] sm:$0xff] %v374
  %391 = vst [vmem:[#allocation2 + $0x68] sm:$0xff] %v375
  %392 = vst [vmem:[#allocation2 + $0x70] sm:$0xff] %v376
  %393 = vst [vmem:[#allocation2 + $0x78] sm:$0xff] %v377
  %v394 = vld [vmem:[#allocation2] sm:$0xff]
  %v395 = vld [vmem:[#allocation2 + $0x8] sm:$0xff]
  %v396 = vld [vmem:[#allocation2 + $0x10] sm:$0xff]
  %v397 = vld [vmem:[#allocation2 + $0x18] sm:$0xff]
  %v398 = vld [vmem:[#allocation2 + $0x20] sm:$0xff]
  %v399 = vld [vmem:[#allocation2 + $0x28] sm:$0xff]
  %v400 = vld [vmem:[#allocation2 + $0x30] sm:$0xff]
  %v401 = vld [vmem:[#allocation2 + $0x38] sm:$0xff]
  %v402 = vld [vmem:[#allocation2 + $0x40] sm:$0xff]
  %v403 = vld [vmem:[#allocation2 + $0x48] sm:$0xff]
  %v404 = vld [vmem:[#allocation2 + $0x50] sm:$0xff]
  %v405 = vld [vmem:[#allocation2 + $0x58] sm:$0xff]
  %v406 = vld [vmem:[#allocation2 + $0x60] sm:$0xff]
  %v407 = vld [vmem:[#allocation2 + $0x68] sm:$0xff]
  %v408 = vld [vmem:[#allocation2 + $0x70] sm:$0xff]
  %v409 = vld [vmem:[#allocation2 + $0x78] sm:$0xff]
  %s410 = scalar_lea.vmem %s2, 128
  %v411 = vld [vmem:[%s410] sm:$0xff]
  %v412 = vld [vmem:[%s410 + $0x8] sm:$0xff]
  %v413 = vld [vmem:[%s410 + $0x10] sm:$0xff]
  %v414 = vld [vmem:[%s410 + $0x18] sm:$0xff]
  %v415 = vld [vmem:[%s410 + $0x20] sm:$0xff]
  %v416 = vld [vmem:[%s410 + $0x28] sm:$0xff]
  %v417 = vld [vmem:[%s410 + $0x30] sm:$0xff]
  %v418 = vld [vmem:[%s410 + $0x38] sm:$0xff]
  %v419 = vld [vmem:[%s410 + $0x40] sm:$0xff]
  %v420 = vld [vmem:[%s410 + $0x48] sm:$0xff]
  %v421 = vld [vmem:[%s410 + $0x50] sm:$0xff]
  %v422 = vld [vmem:[%s410 + $0x58] sm:$0xff]
  %v423 = vld [vmem:[%s410 + $0x60] sm:$0xff]
  %v424 = vld [vmem:[%s410 + $0x68] sm:$0xff]
  %v425 = vld [vmem:[%s410 + $0x70] sm:$0xff]
  %v426 = vld [vmem:[%s410 + $0x78] sm:$0xff]
  %427 = vmatprep.subr.mxu0 0.0
  %428 = vmatpush1.msra.mxu0 %v411
  %429 = vmatprep.subr.mxu0 0.0
  %430 = vmatpush1.msra.mxu0 %v412
  %431 = vmatprep.subr.mxu0 0.0
  %432 = vmatpush1.msra.mxu0 %v413
  %433 = vmatprep.subr.mxu0 0.0
  %434 = vmatpush1.msra.mxu0 %v414
  %435 = vmatprep.subr.mxu0 0.0
  %436 = vmatpush1.msra.mxu0 %v415
  %437 = vmatprep.subr.mxu0 0.0
  %438 = vmatpush1.msra.mxu0 %v416
  %439 = vmatprep.subr.mxu0 0.0
  %440 = vmatpush1.msra.mxu0 %v417
  %441 = vmatprep.subr.mxu0 0.0
  %442 = vmatpush1.msra.mxu0 %v418
  %443 = vmatprep.subr.mxu0 0.0
  %444 = vmatpush1.msra.mxu0 %v419
  %445 = vmatprep.subr.mxu0 0.0
  %446 = vmatpush1.msra.mxu0 %v420
  %447 = vmatprep.subr.mxu0 0.0
  %448 = vmatpush1.msra.mxu0 %v421
  %449 = vmatprep.subr.mxu0 0.0
  %450 = vmatpush1.msra.mxu0 %v422
  %451 = vmatprep.subr.mxu0 0.0
  %452 = vmatpush1.msra.mxu0 %v423
  %453 = vmatprep.subr.mxu0 0.0
  %454 = vmatpush1.msra.mxu0 %v424
  %455 = vmatprep.subr.mxu0 0.0
  %456 = vmatpush1.msra.mxu0 %v425
  %457 = vmatprep.subr.mxu0 0.0
  %458 = vmatpush1.msra.mxu0 %v426
  %459 = vmatprep.subr.mxu0 0.0
  %460 = vmatpush1.msra.mxu0 0.0
  %461 = vmatprep.subr.mxu0 0.0
  %462 = vmatpush1.msra.mxu0 0.0
  %463 = vmatprep.subr.mxu0 0.0
  %464 = vmatpush1.msra.mxu0 0.0
  %465 = vmatprep.subr.mxu0 0.0
  %466 = vmatpush1.msra.mxu0 0.0
  %467 = vmatprep.subr.mxu0 0.0
  %468 = vmatpush1.msra.mxu0 0.0
  %469 = vmatprep.subr.mxu0 0.0
  %470 = vmatpush1.msra.mxu0 0.0
  %471 = vmatprep.subr.mxu0 0.0
  %472 = vmatpush1.msra.mxu0 0.0
  %473 = vmatprep.subr.mxu0 0.0
  %474 = vmatpush1.msra.mxu0 0.0
  %475 = vmatprep.subr.mxu0 0.0
  %476 = vmatpush1.msra.mxu0 0.0
  %477 = vmatprep.subr.mxu0 0.0
  %478 = vmatpush1.msra.mxu0 0.0
  %479 = vmatprep.subr.mxu0 0.0
  %480 = vmatpush1.msra.mxu0 0.0
  %481 = vmatprep.subr.mxu0 0.0
  %482 = vmatpush1.msra.mxu0 0.0
  %483 = vmatprep.subr.mxu0 0.0
  %484 = vmatpush1.msra.mxu0 0.0
  %485 = vmatprep.subr.mxu0 0.0
  %486 = vmatpush1.msra.mxu0 0.0
  %487 = vmatprep.subr.mxu0 0.0
  %488 = vmatpush1.msra.mxu0 0.0
  %489 = vmatprep.subr.mxu0 0.0
  %490 = vmatpush1.msra.mxu0 0.0
  %491 = vmatprep.mubr.f32.mxu0 0.0
  %492 = vmatmul.mubr.f32.gmra.mrb[0].mxu0 %v394
  %v493 = vpop.f32.mrb[0].mxu0
  %v494 = vadd.f32 0.0, %v493
  %v495 = vpop.f32.mrb[0].mxu0
  %496 = vmatprep.mubr.f32.mxu0 0.0
  %497 = vmatmul.mubr.f32.gmra.mrb[0].mxu0 %v395
  %v498 = vpop.f32.mrb[0].mxu0
  %v499 = vadd.f32 0.0, %v498
  %v500 = vpop.f32.mrb[0].mxu0
  %501 = vmatprep.mubr.f32.mxu0 0.0
  %502 = vmatmul.mubr.f32.gmra.mrb[0].mxu0 %v396
  %v503 = vpop.f32.mrb[0].mxu0
  %v504 = vadd.f32 0.0, %v503
  %v505 = vpop.f32.mrb[0].mxu0
  %506 = vmatprep.mubr.f32.mxu0 0.0
  %507 = vmatmul.mubr.f32.gmra.mrb[0].mxu0 %v397
  %v508 = vpop.f32.mrb[0].mxu0
  %v509 = vadd.f32 0.0, %v508
  %v510 = vpop.f32.mrb[0].mxu0
  %511 = vmatprep.mubr.f32.mxu0 0.0
  %512 = vmatmul.mubr.f32.gmra.mrb[0].mxu0 %v398
  %v513 = vpop.f32.mrb[0].mxu0
  %v514 = vadd.f32 0.0, %v513
  %v515 = vpop.f32.mrb[0].mxu0
  %516 = vmatprep.mubr.f32.mxu0 0.0
  %517 = vmatmul.mubr.f32.gmra.mrb[0].mxu0 %v399
  %v518 = vpop.f32.mrb[0].mxu0
  %v519 = vadd.f32 0.0, %v518
  %v520 = vpop.f32.mrb[0].mxu0
  %521 = vmatprep.mubr.f32.mxu0 0.0
  %522 = vmatmul.mubr.f32.gmra.mrb[0].mxu0 %v400
  %v523 = vpop.f32.mrb[0].mxu0
  %v524 = vadd.f32 0.0, %v523
  %v525 = vpop.f32.mrb[0].mxu0
  %526 = vmatprep.mubr.f32.mxu0 0.0
  %527 = vmatmul.mubr.f32.gmra.mrb[0].mxu0 %v401
  %v528 = vpop.f32.mrb[0].mxu0
  %v529 = vadd.f32 0.0, %v528
  %v530 = vpop.f32.mrb[0].mxu0
  %531 = vmatprep.mubr.f32.mxu0 0.0
  %532 = vmatmul.mubr.f32.gmra.mrb[0].mxu0 %v402
  %v533 = vpop.f32.mrb[0].mxu0
  %v534 = vadd.f32 0.0, %v533
  %v535 = vpop.f32.mrb[0].mxu0
  %536 = vmatprep.mubr.f32.mxu0 0.0
  %537 = vmatmul.mubr.f32.gmra.mrb[0].mxu0 %v403
  %v538 = vpop.f32.mrb[0].mxu0
  %v539 = vadd.f32 0.0, %v538
  %v540 = vpop.f32.mrb[0].mxu0
  %541 = vmatprep.mubr.f32.mxu0 0.0
  %542 = vmatmul.mubr.f32.gmra.mrb[0].mxu0 %v404
  %v543 = vpop.f32.mrb[0].mxu0
  %v544 = vadd.f32 0.0, %v543
  %v545 = vpop.f32.mrb[0].mxu0
  %546 = vmatprep.mubr.f32.mxu0 0.0
  %547 = vmatmul.mubr.f32.gmra.mrb[0].mxu0 %v405
  %v548 = vpop.f32.mrb[0].mxu0
  %v549 = vadd.f32 0.0, %v548
  %v550 = vpop.f32.mrb[0].mxu0
  %551 = vmatprep.mubr.f32.mxu0 0.0
  %552 = vmatmul.mubr.f32.gmra.mrb[0].mxu0 %v406
  %v553 = vpop.f32.mrb[0].mxu0
  %v554 = vadd.f32 0.0, %v553
  %v555 = vpop.f32.mrb[0].mxu0
  %556 = vmatprep.mubr.f32.mxu0 0.0
  %557 = vmatmul.mubr.f32.gmra.mrb[0].mxu0 %v407
  %v558 = vpop.f32.mrb[0].mxu0
  %v559 = vadd.f32 0.0, %v558
  %v560 = vpop.f32.mrb[0].mxu0
  %561 = vmatprep.mubr.f32.mxu0 0.0
  %562 = vmatmul.mubr.f32.gmra.mrb[0].mxu0 %v408
  %v563 = vpop.f32.mrb[0].mxu0
  %v564 = vadd.f32 0.0, %v563
  %v565 = vpop.f32.mrb[0].mxu0
  %566 = vmatprep.mubr.f32.mxu0 0.0
  %567 = vmatmul.mubr.f32.gmra.mrb[0].mxu0 %v409
  %v568 = vpop.f32.mrb[0].mxu0
  %v569 = vadd.f32 0.0, %v568
  %v570 = vpop.f32.mrb[0].mxu0
  %571 = vdwg.mxu0
  %v572 = vld [vmem:[%s0] sm:$0xff]
  %v573 = vld [vmem:[%s0 + $0x8] sm:$0xff]
  %v574 = vld [vmem:[%s0 + $0x10] sm:$0xff]
  %v575 = vld [vmem:[%s0 + $0x18] sm:$0xff]
  %v576 = vld [vmem:[%s0 + $0x20] sm:$0xff]
  %v577 = vld [vmem:[%s0 + $0x28] sm:$0xff]
  %v578 = vld [vmem:[%s0 + $0x30] sm:$0xff]
  %v579 = vld [vmem:[%s0 + $0x38] sm:$0xff]
  %v580 = vld [vmem:[%s0 + $0x40] sm:$0xff]
  %v581 = vld [vmem:[%s0 + $0x48] sm:$0xff]
  %v582 = vld [vmem:[%s0 + $0x50] sm:$0xff]
  %v583 = vld [vmem:[%s0 + $0x58] sm:$0xff]
  %v584 = vld [vmem:[%s0 + $0x60] sm:$0xff]
  %v585 = vld [vmem:[%s0 + $0x68] sm:$0xff]
  %v586 = vld [vmem:[%s0 + $0x70] sm:$0xff]
  %v587 = vld [vmem:[%s0 + $0x78] sm:$0xff]
  %s588 = scalar_lea.vmem %s3, 1
  %v589 = vld [vmem:[%s588] sm:$0x1]
  %v591 = vlaneseq
  %v592 = vshrl.u32 %v591, 7
  %v593 = vsub.s32 0, %v592
  %v594 = vrot.slane %v589, %v593
  %596 = vmatprep.subr.mxu0 0.0
  %597 = vmatpush1.msra.mxu0 %v494
  %598 = vmatprep.subr.mxu0 0.0
  %599 = vmatpush1.msra.mxu0 %v499
  %600 = vmatprep.subr.mxu0 0.0
  %601 = vmatpush1.msra.mxu0 %v504
  %602 = vmatprep.subr.mxu0 0.0
  %603 = vmatpush1.msra.mxu0 %v509
  %604 = vmatprep.subr.mxu0 0.0
  %605 = vmatpush1.msra.mxu0 %v514
  %606 = vmatprep.subr.mxu0 0.0
  %607 = vmatpush1.msra.mxu0 %v519
  %608 = vmatprep.subr.mxu0 0.0
  %609 = vmatpush1.msra.mxu0 %v524
  %610 = vmatprep.subr.mxu0 0.0
  %611 = vmatpush1.msra.mxu0 %v529
  %612 = vmatprep.subr.mxu0 0.0
  %613 = vmatpush1.msra.mxu0 %v534
  %614 = vmatprep.subr.mxu0 0.0
  %615 = vmatpush1.msra.mxu0 %v539
  %616 = vmatprep.subr.mxu0 0.0
  %617 = vmatpush1.msra.mxu0 %v544
  %618 = vmatprep.subr.mxu0 0.0
  %619 = vmatpush1.msra.mxu0 %v549
  %620 = vmatprep.subr.mxu0 0.0
  %621 = vmatpush1.msra.mxu0 %v554
  %622 = vmatprep.subr.mxu0 0.0
  %623 = vmatpush1.msra.mxu0 %v559
  %624 = vmatprep.subr.mxu0 0.0
  %625 = vmatpush1.msra.mxu0 %v564
  %626 = vmatprep.subr.mxu0 0.0
  %627 = vmatpush1.msra.mxu0 %v569
  %628 = vmatprep.subr.mxu0 0.0
  %629 = vmatpush1.msra.mxu0 0.0
  %630 = vmatprep.subr.mxu0 0.0
  %631 = vmatpush1.msra.mxu0 0.0
  %632 = vmatprep.subr.mxu0 0.0
  %633 = vmatpush1.msra.mxu0 0.0
  %634 = vmatprep.subr.mxu0 0.0
  %635 = vmatpush1.msra.mxu0 0.0
  %636 = vmatprep.subr.mxu0 0.0
  %637 = vmatpush1.msra.mxu0 0.0
  %638 = vmatprep.subr.mxu0 0.0
  %639 = vmatpush1.msra.mxu0 0.0
  %640 = vmatprep.subr.mxu0 0.0
  %641 = vmatpush1.msra.mxu0 0.0
  %642 = vmatprep.subr.mxu0 0.0
  %643 = vmatpush1.msra.mxu0 0.0
  %644 = vmatprep.subr.mxu0 0.0
  %645 = vmatpush1.msra.mxu0 0.0
  %646 = vmatprep.subr.mxu0 0.0
  %647 = vmatpush1.msra.mxu0 0.0
  %648 = vmatprep.subr.mxu0 0.0
  %649 = vmatpush1.msra.mxu0 0.0
  %650 = vmatprep.subr.mxu0 0.0
  %651 = vmatpush1.msra.mxu0 0.0
  %652 = vmatprep.subr.mxu0 0.0
  %653 = vmatpush1.msra.mxu0 0.0
  %654 = vmatprep.subr.mxu0 0.0
  %655 = vmatpush1.msra.mxu0 0.0
  %656 = vmatprep.subr.mxu0 0.0
  %657 = vmatpush1.msra.mxu0 0.0
  %658 = vmatprep.subr.mxu0 0.0
  %659 = vmatpush1.msra.mxu0 0.0
  %660 = vmatprep.mubr.f32.mxu0 0.0
  %661 = vmatmul.mubr.f32.gmra.mrb[0].mxu0 %v572
  %v662 = vpop.f32.mrb[0].mxu0
  %v663 = vadd.f32 %v594, %v662
  %v664 = vpop.f32.mrb[0].mxu0
  %665 = vmatprep.mubr.f32.mxu0 0.0
  %666 = vmatmul.mubr.f32.gmra.mrb[0].mxu0 %v573
  %v667 = vpop.f32.mrb[0].mxu0
  %v668 = vadd.f32 %v594, %v667
  %v669 = vpop.f32.mrb[0].mxu0
  %670 = vmatprep.mubr.f32.mxu0 0.0
  %671 = vmatmul.mubr.f32.gmra.mrb[0].mxu0 %v574
  %v672 = vpop.f32.mrb[0].mxu0
  %v673 = vadd.f32 %v594, %v672
  %v674 = vpop.f32.mrb[0].mxu0
  %675 = vmatprep.mubr.f32.mxu0 0.0
  %676 = vmatmul.mubr.f32.gmra.mrb[0].mxu0 %v575
  %v677 = vpop.f32.mrb[0].mxu0
  %v678 = vadd.f32 %v594, %v677
  %v679 = vpop.f32.mrb[0].mxu0
  %680 = vmatprep.mubr.f32.mxu0 0.0
  %681 = vmatmul.mubr.f32.gmra.mrb[0].mxu0 %v576
  %v682 = vpop.f32.mrb[0].mxu0
  %v683 = vadd.f32 %v594, %v682
  %v684 = vpop.f32.mrb[0].mxu0
  %685 = vmatprep.mubr.f32.mxu0 0.0
  %686 = vmatmul.mubr.f32.gmra.mrb[0].mxu0 %v577
  %v687 = vpop.f32.mrb[0].mxu0
  %v688 = vadd.f32 %v594, %v687
  %v689 = vpop.f32.mrb[0].mxu0
  %690 = vmatprep.mubr.f32.mxu0 0.0
  %691 = vmatmul.mubr.f32.gmra.mrb[0].mxu0 %v578
  %v692 = vpop.f32.mrb[0].mxu0
  %v693 = vadd.f32 %v594, %v692
  %v694 = vpop.f32.mrb[0].mxu0
  %695 = vmatprep.mubr.f32.mxu0 0.0
  %696 = vmatmul.mubr.f32.gmra.mrb[0].mxu0 %v579
  %v697 = vpop.f32.mrb[0].mxu0
  %v698 = vadd.f32 %v594, %v697
  %v699 = vpop.f32.mrb[0].mxu0
  %700 = vmatprep.mubr.f32.mxu0 0.0
  %701 = vmatmul.mubr.f32.gmra.mrb[0].mxu0 %v580
  %v702 = vpop.f32.mrb[0].mxu0
  %v703 = vadd.f32 %v594, %v702
  %v704 = vpop.f32.mrb[0].mxu0
  %705 = vmatprep.mubr.f32.mxu0 0.0
  %706 = vmatmul.mubr.f32.gmra.mrb[0].mxu0 %v581
  %v707 = vpop.f32.mrb[0].mxu0
  %v708 = vadd.f32 %v594, %v707
  %v709 = vpop.f32.mrb[0].mxu0
  %710 = vmatprep.mubr.f32.mxu0 0.0
  %711 = vmatmul.mubr.f32.gmra.mrb[0].mxu0 %v582
  %v712 = vpop.f32.mrb[0].mxu0
  %v713 = vadd.f32 %v594, %v712
  %v714 = vpop.f32.mrb[0].mxu0
  %715 = vmatprep.mubr.f32.mxu0 0.0
  %716 = vmatmul.mubr.f32.gmra.mrb[0].mxu0 %v583
  %v717 = vpop.f32.mrb[0].mxu0
  %v718 = vadd.f32 %v594, %v717
  %v719 = vpop.f32.mrb[0].mxu0
  %720 = vmatprep.mubr.f32.mxu0 0.0
  %721 = vmatmul.mubr.f32.gmra.mrb[0].mxu0 %v584
  %v722 = vpop.f32.mrb[0].mxu0
  %v723 = vadd.f32 %v594, %v722
  %v724 = vpop.f32.mrb[0].mxu0
  %725 = vmatprep.mubr.f32.mxu0 0.0
  %726 = vmatmul.mubr.f32.gmra.mrb[0].mxu0 %v585
  %v727 = vpop.f32.mrb[0].mxu0
  %v728 = vadd.f32 %v594, %v727
  %v729 = vpop.f32.mrb[0].mxu0
  %730 = vmatprep.mubr.f32.mxu0 0.0
  %731 = vmatmul.mubr.f32.gmra.mrb[0].mxu0 %v586
  %v732 = vpop.f32.mrb[0].mxu0
  %v733 = vadd.f32 %v594, %v732
  %v734 = vpop.f32.mrb[0].mxu0
  %735 = vmatprep.mubr.f32.mxu0 0.0
  %736 = vmatmul.mubr.f32.gmra.mrb[0].mxu0 %v587
  %v737 = vpop.f32.mrb[0].mxu0
  %v738 = vadd.f32 %v594, %v737
  %v739 = vpop.f32.mrb[0].mxu0
  %740 = vdwg.mxu0
  %v741 = vmax.f32 %v663, 0.0
  %v742 = vmax.f32 %v668, 0.0
  %v743 = vmax.f32 %v673, 0.0
  %v744 = vmax.f32 %v678, 0.0
  %v745 = vmax.f32 %v683, 0.0
  %v746 = vmax.f32 %v688, 0.0
  %v747 = vmax.f32 %v693, 0.0
  %v748 = vmax.f32 %v698, 0.0
  %v749 = vmax.f32 %v703, 0.0
  %v750 = vmax.f32 %v708, 0.0
  %v751 = vmax.f32 %v713, 0.0
  %v752 = vmax.f32 %v718, 0.0
  %v753 = vmax.f32 %v723, 0.0
  %v754 = vmax.f32 %v728, 0.0
  %v755 = vmax.f32 %v733, 0.0
  %v756 = vmax.f32 %v738, 0.0
  %757 = vst [vmem:[#allocation3] sm:$0xff] %v741
  %758 = vst [vmem:[#allocation3 + $0x8] sm:$0xff] %v742
  %759 = vst [vmem:[#allocation3 + $0x10] sm:$0xff] %v743
  %760 = vst [vmem:[#allocation3 + $0x18] sm:$0xff] %v744
  %761 = vst [vmem:[#allocation3 + $0x20] sm:$0xff] %v745
  %762 = vst [vmem:[#allocation3 + $0x28] sm:$0xff] %v746
  %763 = vst [vmem:[#allocation3 + $0x30] sm:$0xff] %v747
  %764 = vst [vmem:[#allocation3 + $0x38] sm:$0xff] %v748
  %765 = vst [vmem:[#allocation3 + $0x40] sm:$0xff] %v749
  %766 = vst [vmem:[#allocation3 + $0x48] sm:$0xff] %v750
  %767 = vst [vmem:[#allocation3 + $0x50] sm:$0xff] %v751
  %768 = vst [vmem:[#allocation3 + $0x58] sm:$0xff] %v752
  %769 = vst [vmem:[#allocation3 + $0x60] sm:$0xff] %v753
  %770 = vst [vmem:[#allocation3 + $0x68] sm:$0xff] %v754
  %771 = vst [vmem:[#allocation3 + $0x70] sm:$0xff] %v755
  %772 = vst [vmem:[#allocation3 + $0x78] sm:$0xff] %v756
  %v773 = vld [vmem:[#allocation3] sm:$0xff]
  %v774 = vld [vmem:[#allocation3 + $0x8] sm:$0xff]
  %v775 = vld [vmem:[#allocation3 + $0x10] sm:$0xff]
  %v776 = vld [vmem:[#allocation3 + $0x18] sm:$0xff]
  %v777 = vld [vmem:[#allocation3 + $0x20] sm:$0xff]
  %v778 = vld [vmem:[#allocation3 + $0x28] sm:$0xff]
  %v779 = vld [vmem:[#allocation3 + $0x30] sm:$0xff]
  %v780 = vld [vmem:[#allocation3 + $0x38] sm:$0xff]
  %v781 = vld [vmem:[#allocation3 + $0x40] sm:$0xff]
  %v782 = vld [vmem:[#allocation3 + $0x48] sm:$0xff]
  %v783 = vld [vmem:[#allocation3 + $0x50] sm:$0xff]
  %v784 = vld [vmem:[#allocation3 + $0x58] sm:$0xff]
  %v785 = vld [vmem:[#allocation3 + $0x60] sm:$0xff]
  %v786 = vld [vmem:[#allocation3 + $0x68] sm:$0xff]
  %v787 = vld [vmem:[#allocation3 + $0x70] sm:$0xff]
  %v788 = vld [vmem:[#allocation3 + $0x78] sm:$0xff]
  %s789 = scalar_lea.vmem %s2, 256
  %v790 = vld [vmem:[%s789] sm:$0xff]
  %v791 = vld [vmem:[%s789 + $0x8] sm:$0xff]
  %v792 = vld [vmem:[%s789 + $0x10] sm:$0xff]
  %v793 = vld [vmem:[%s789 + $0x18] sm:$0xff]
  %v794 = vld [vmem:[%s789 + $0x20] sm:$0xff]
  %v795 = vld [vmem:[%s789 + $0x28] sm:$0xff]
  %v796 = vld [vmem:[%s789 + $0x30] sm:$0xff]
  %v797 = vld [vmem:[%s789 + $0x38] sm:$0xff]
  %v798 = vld [vmem:[%s789 + $0x40] sm:$0xff]
  %v799 = vld [vmem:[%s789 + $0x48] sm:$0xff]
  %v800 = vld [vmem:[%s789 + $0x50] sm:$0xff]
  %v801 = vld [vmem:[%s789 + $0x58] sm:$0xff]
  %v802 = vld [vmem:[%s789 + $0x60] sm:$0xff]
  %v803 = vld [vmem:[%s789 + $0x68] sm:$0xff]
  %v804 = vld [vmem:[%s789 + $0x70] sm:$0xff]
  %v805 = vld [vmem:[%s789 + $0x78] sm:$0xff]
  %806 = vmatprep.subr.mxu0 0.0
  %807 = vmatpush1.msra.mxu0 %v790
  %808 = vmatprep.subr.mxu0 0.0
  %809 = vmatpush1.msra.mxu0 %v791
  %810 = vmatprep.subr.mxu0 0.0
  %811 = vmatpush1.msra.mxu0 %v792
  %812 = vmatprep.subr.mxu0 0.0
  %813 = vmatpush1.msra.mxu0 %v793
  %814 = vmatprep.subr.mxu0 0.0
  %815 = vmatpush1.msra.mxu0 %v794
  %816 = vmatprep.subr.mxu0 0.0
  %817 = vmatpush1.msra.mxu0 %v795
  %818 = vmatprep.subr.mxu0 0.0
  %819 = vmatpush1.msra.mxu0 %v796
  %820 = vmatprep.subr.mxu0 0.0
  %821 = vmatpush1.msra.mxu0 %v797
  %822 = vmatprep.subr.mxu0 0.0
  %823 = vmatpush1.msra.mxu0 %v798
  %824 = vmatprep.subr.mxu0 0.0
  %825 = vmatpush1.msra.mxu0 %v799
  %826 = vmatprep.subr.mxu0 0.0
  %827 = vmatpush1.msra.mxu0 %v800
  %828 = vmatprep.subr.mxu0 0.0
  %829 = vmatpush1.msra.mxu0 %v801
  %830 = vmatprep.subr.mxu0 0.0
  %831 = vmatpush1.msra.mxu0 %v802
  %832 = vmatprep.subr.mxu0 0.0
  %833 = vmatpush1.msra.mxu0 %v803
  %834 = vmatprep.subr.mxu0 0.0
  %835 = vmatpush1.msra.mxu0 %v804
  %836 = vmatprep.subr.mxu0 0.0
  %837 = vmatpush1.msra.mxu0 %v805
  %838 = vmatprep.subr.mxu0 0.0
  %839 = vmatpush1.msra.mxu0 0.0
  %840 = vmatprep.subr.mxu0 0.0
  %841 = vmatpush1.msra.mxu0 0.0
  %842 = vmatprep.subr.mxu0 0.0
  %843 = vmatpush1.msra.mxu0 0.0
  %844 = vmatprep.subr.mxu0 0.0
  %845 = vmatpush1.msra.mxu0 0.0
  %846 = vmatprep.subr.mxu0 0.0
  %847 = vmatpush1.msra.mxu0 0.0
  %848 = vmatprep.subr.mxu0 0.0
  %849 = vmatpush1.msra.mxu0 0.0
  %850 = vmatprep.subr.mxu0 0.0
  %851 = vmatpush1.msra.mxu0 0.0
  %852 = vmatprep.subr.mxu0 0.0
  %853 = vmatpush1.msra.mxu0 0.0
  %854 = vmatprep.subr.mxu0 0.0
  %855 = vmatpush1.msra.mxu0 0.0
  %856 = vmatprep.subr.mxu0 0.0
  %857 = vmatpush1.msra.mxu0 0.0
  %858 = vmatprep.subr.mxu0 0.0
  %859 = vmatpush1.msra.mxu0 0.0
  %860 = vmatprep.subr.mxu0 0.0
  %861 = vmatpush1.msra.mxu0 0.0
  %862 = vmatprep.subr.mxu0 0.0
  %863 = vmatpush1.msra.mxu0 0.0
  %864 = vmatprep.subr.mxu0 0.0
  %865 = vmatpush1.msra.mxu0 0.0
  %866 = vmatprep.subr.mxu0 0.0
  %867 = vmatpush1.msra.mxu0 0.0
  %868 = vmatprep.subr.mxu0 0.0
  %869 = vmatpush1.msra.mxu0 0.0
  %870 = vmatprep.mubr.f32.mxu0 0.0
  %871 = vmatmul.mubr.f32.gmra.mrb[0].mxu0 %v773
  %v872 = vpop.f32.mrb[0].mxu0
  %v873 = vadd.f32 0.0, %v872
  %v874 = vpop.f32.mrb[0].mxu0
  %875 = vmatprep.mubr.f32.mxu0 0.0
  %876 = vmatmul.mubr.f32.gmra.mrb[0].mxu0 %v774
  %v877 = vpop.f32.mrb[0].mxu0
  %v878 = vadd.f32 0.0, %v877
  %v879 = vpop.f32.mrb[0].mxu0
  %880 = vmatprep.mubr.f32.mxu0 0.0
  %881 = vmatmul.mubr.f32.gmra.mrb[0].mxu0 %v775
  %v882 = vpop.f32.mrb[0].mxu0
  %v883 = vadd.f32 0.0, %v882
  %v884 = vpop.f32.mrb[0].mxu0
  %885 = vmatprep.mubr.f32.mxu0 0.0
  %886 = vmatmul.mubr.f32.gmra.mrb[0].mxu0 %v776
  %v887 = vpop.f32.mrb[0].mxu0
  %v888 = vadd.f32 0.0, %v887
  %v889 = vpop.f32.mrb[0].mxu0
  %890 = vmatprep.mubr.f32.mxu0 0.0
  %891 = vmatmul.mubr.f32.gmra.mrb[0].mxu0 %v777
  %v892 = vpop.f32.mrb[0].mxu0
  %v893 = vadd.f32 0.0, %v892
  %v894 = vpop.f32.mrb[0].mxu0
  %895 = vmatprep.mubr.f32.mxu0 0.0
  %896 = vmatmul.mubr.f32.gmra.mrb[0].mxu0 %v778
  %v897 = vpop.f32.mrb[0].mxu0
  %v898 = vadd.f32 0.0, %v897
  %v899 = vpop.f32.mrb[0].mxu0
  %900 = vmatprep.mubr.f32.mxu0 0.0
  %901 = vmatmul.mubr.f32.gmra.mrb[0].mxu0 %v779
  %v902 = vpop.f32.mrb[0].mxu0
  %v903 = vadd.f32 0.0, %v902
  %v904 = vpop.f32.mrb[0].mxu0
  %905 = vmatprep.mubr.f32.mxu0 0.0
  %906 = vmatmul.mubr.f32.gmra.mrb[0].mxu0 %v780
  %v907 = vpop.f32.mrb[0].mxu0
  %v908 = vadd.f32 0.0, %v907
  %v909 = vpop.f32.mrb[0].mxu0
  %910 = vmatprep.mubr.f32.mxu0 0.0
  %911 = vmatmul.mubr.f32.gmra.mrb[0].mxu0 %v781
  %v912 = vpop.f32.mrb[0].mxu0
  %v913 = vadd.f32 0.0, %v912
  %v914 = vpop.f32.mrb[0].mxu0
  %915 = vmatprep.mubr.f32.mxu0 0.0
  %916 = vmatmul.mubr.f32.gmra.mrb[0].mxu0 %v782
  %v917 = vpop.f32.mrb[0].mxu0
  %v918 = vadd.f32 0.0, %v917
  %v919 = vpop.f32.mrb[0].mxu0
  %920 = vmatprep.mubr.f32.mxu0 0.0
  %921 = vmatmul.mubr.f32.gmra.mrb[0].mxu0 %v783
  %v922 = vpop.f32.mrb[0].mxu0
  %v923 = vadd.f32 0.0, %v922
  %v924 = vpop.f32.mrb[0].mxu0
  %925 = vmatprep.mubr.f32.mxu0 0.0
  %926 = vmatmul.mubr.f32.gmra.mrb[0].mxu0 %v784
  %v927 = vpop.f32.mrb[0].mxu0
  %v928 = vadd.f32 0.0, %v927
  %v929 = vpop.f32.mrb[0].mxu0
  %930 = vmatprep.mubr.f32.mxu0 0.0
  %931 = vmatmul.mubr.f32.gmra.mrb[0].mxu0 %v785
  %v932 = vpop.f32.mrb[0].mxu0
  %v933 = vadd.f32 0.0, %v932
  %v934 = vpop.f32.mrb[0].mxu0
  %935 = vmatprep.mubr.f32.mxu0 0.0
  %936 = vmatmul.mubr.f32.gmra.mrb[0].mxu0 %v786
  %v937 = vpop.f32.mrb[0].mxu0
  %v938 = vadd.f32 0.0, %v937
  %v939 = vpop.f32.mrb[0].mxu0
  %940 = vmatprep.mubr.f32.mxu0 0.0
  %941 = vmatmul.mubr.f32.gmra.mrb[0].mxu0 %v787
  %v942 = vpop.f32.mrb[0].mxu0
  %v943 = vadd.f32 0.0, %v942
  %v944 = vpop.f32.mrb[0].mxu0
  %945 = vmatprep.mubr.f32.mxu0 0.0
  %946 = vmatmul.mubr.f32.gmra.mrb[0].mxu0 %v788
  %v947 = vpop.f32.mrb[0].mxu0
  %v948 = vadd.f32 0.0, %v947
  %v949 = vpop.f32.mrb[0].mxu0
  %950 = vdwg.mxu0
  %v951 = vld [vmem:[%s0] sm:$0xff]
  %v952 = vld [vmem:[%s0 + $0x8] sm:$0xff]
  %v953 = vld [vmem:[%s0 + $0x10] sm:$0xff]
  %v954 = vld [vmem:[%s0 + $0x18] sm:$0xff]
  %v955 = vld [vmem:[%s0 + $0x20] sm:$0xff]
  %v956 = vld [vmem:[%s0 + $0x28] sm:$0xff]
  %v957 = vld [vmem:[%s0 + $0x30] sm:$0xff]
  %v958 = vld [vmem:[%s0 + $0x38] sm:$0xff]
  %v959 = vld [vmem:[%s0 + $0x40] sm:$0xff]
  %v960 = vld [vmem:[%s0 + $0x48] sm:$0xff]
  %v961 = vld [vmem:[%s0 + $0x50] sm:$0xff]
  %v962 = vld [vmem:[%s0 + $0x58] sm:$0xff]
  %v963 = vld [vmem:[%s0 + $0x60] sm:$0xff]
  %v964 = vld [vmem:[%s0 + $0x68] sm:$0xff]
  %v965 = vld [vmem:[%s0 + $0x70] sm:$0xff]
  %v966 = vld [vmem:[%s0 + $0x78] sm:$0xff]
  %s967 = scalar_lea.vmem %s3, 2
  %v968 = vld [vmem:[%s967] sm:$0x1]
  %v970 = vlaneseq
  %v971 = vshrl.u32 %v970, 7
  %v972 = vsub.s32 0, %v971
  %v973 = vrot.slane %v968, %v972
  %975 = vmatprep.subr.mxu0 0.0
  %976 = vmatpush1.msra.mxu0 %v873
  %977 = vmatprep.subr.mxu0 0.0
  %978 = vmatpush1.msra.mxu0 %v878
  %979 = vmatprep.subr.mxu0 0.0
  %980 = vmatpush1.msra.mxu0 %v883
  %981 = vmatprep.subr.mxu0 0.0
  %982 = vmatpush1.msra.mxu0 %v888
  %983 = vmatprep.subr.mxu0 0.0
  %984 = vmatpush1.msra.mxu0 %v893
  %985 = vmatprep.subr.mxu0 0.0
  %986 = vmatpush1.msra.mxu0 %v898
  %987 = vmatprep.subr.mxu0 0.0
  %988 = vmatpush1.msra.mxu0 %v903
  %989 = vmatprep.subr.mxu0 0.0
  %990 = vmatpush1.msra.mxu0 %v908
  %991 = vmatprep.subr.mxu0 0.0
  %992 = vmatpush1.msra.mxu0 %v913
  %993 = vmatprep.subr.mxu0 0.0
  %994 = vmatpush1.msra.mxu0 %v918
  %995 = vmatprep.subr.mxu0 0.0
  %996 = vmatpush1.msra.mxu0 %v923
  %997 = vmatprep.subr.mxu0 0.0
  %998 = vmatpush1.msra.mxu0 %v928
  %999 = vmatprep.subr.mxu0 0.0
  %1000 = vmatpush1.msra.mxu0 %v933
  %1001 = vmatprep.subr.mxu0 0.0
  %1002 = vmatpush1.msra.mxu0 %v938
  %1003 = vmatprep.subr.mxu0 0.0
  %1004 = vmatpush1.msra.mxu0 %v943
  %1005 = vmatprep.subr.mxu0 0.0
  %1006 = vmatpush1.msra.mxu0 %v948
  %1007 = vmatprep.subr.mxu0 0.0
  %1008 = vmatpush1.msra.mxu0 0.0
  %1009 = vmatprep.subr.mxu0 0.0
  %1010 = vmatpush1.msra.mxu0 0.0
  %1011 = vmatprep.subr.mxu0 0.0
  %1012 = vmatpush1.msra.mxu0 0.0
  %1013 = vmatprep.subr.mxu0 0.0
  %1014 = vmatpush1.msra.mxu0 0.0
  %1015 = vmatprep.subr.mxu0 0.0
  %1016 = vmatpush1.msra.mxu0 0.0
  %1017 = vmatprep.subr.mxu0 0.0
  %1018 = vmatpush1.msra.mxu0 0.0
  %1019 = vmatprep.subr.mxu0 0.0
  %1020 = vmatpush1.msra.mxu0 0.0
  %1021 = vmatprep.subr.mxu0 0.0
  %1022 = vmatpush1.msra.mxu0 0.0
  %1023 = vmatprep.subr.mxu0 0.0
  %1024 = vmatpush1.msra.mxu0 0.0
  %1025 = vmatprep.subr.mxu0 0.0
  %1026 = vmatpush1.msra.mxu0 0.0
  %1027 = vmatprep.subr.mxu0 0.0
  %1028 = vmatpush1.msra.mxu0 0.0
  %1029 = vmatprep.subr.mxu0 0.0
  %1030 = vmatpush1.msra.mxu0 0.0
  %1031 = vmatprep.subr.mxu0 0.0
  %1032 = vmatpush1.msra.mxu0 0.0
  %1033 = vmatprep.subr.mxu0 0.0
  %1034 = vmatpush1.msra.mxu0 0.0
  %1035 = vmatprep.subr.mxu0 0.0
  %1036 = vmatpush1.msra.mxu0 0.0
  %1037 = vmatprep.subr.mxu0 0.0
  %1038 = vmatpush1.msra.mxu0 0.0
  %1039 = vmatprep.mubr.f32.mxu0 0.0
  %1040 = vmatmul.mubr.f32.gmra.mrb[0].mxu0 %v951
  %v1041 = vpop.f32.mrb[0].mxu0
  %v1042 = vadd.f32 %v973, %v1041
  %v1043 = vpop.f32.mrb[0].mxu0
  %1044 = vmatprep.mubr.f32.mxu0 0.0
  %1045 = vmatmul.mubr.f32.gmra.mrb[0].mxu0 %v952
  %v1046 = vpop.f32.mrb[0].mxu0
  %v1047 = vadd.f32 %v973, %v1046
  %v1048 = vpop.f32.mrb[0].mxu0
  %1049 = vmatprep.mubr.f32.mxu0 0.0
  %1050 = vmatmul.mubr.f32.gmra.mrb[0].mxu0 %v953
  %v1051 = vpop.f32.mrb[0].mxu0
  %v1052 = vadd.f32 %v973, %v1051
  %v1053 = vpop.f32.mrb[0].mxu0
  %1054 = vmatprep.mubr.f32.mxu0 0.0
  %1055 = vmatmul.mubr.f32.gmra.mrb[0].mxu0 %v954
  %v1056 = vpop.f32.mrb[0].mxu0
  %v1057 = vadd.f32 %v973, %v1056
  %v1058 = vpop.f32.mrb[0].mxu0
  %1059 = vmatprep.mubr.f32.mxu0 0.0
  %1060 = vmatmul.mubr.f32.gmra.mrb[0].mxu0 %v955
  %v1061 = vpop.f32.mrb[0].mxu0
  %v1062 = vadd.f32 %v973, %v1061
  %v1063 = vpop.f32.mrb[0].mxu0
  %1064 = vmatprep.mubr.f32.mxu0 0.0
  %1065 = vmatmul.mubr.f32.gmra.mrb[0].mxu0 %v956
  %v1066 = vpop.f32.mrb[0].mxu0
  %v1067 = vadd.f32 %v973, %v1066
  %v1068 = vpop.f32.mrb[0].mxu0
  %1069 = vmatprep.mubr.f32.mxu0 0.0
  %1070 = vmatmul.mubr.f32.gmra.mrb[0].mxu0 %v957
  %v1071 = vpop.f32.mrb[0].mxu0
  %v1072 = vadd.f32 %v973, %v1071
  %v1073 = vpop.f32.mrb[0].mxu0
  %1074 = vmatprep.mubr.f32.mxu0 0.0
  %1075 = vmatmul.mubr.f32.gmra.mrb[0].mxu0 %v958
  %v1076 = vpop.f32.mrb[0].mxu0
  %v1077 = vadd.f32 %v973, %v1076
  %v1078 = vpop.f32.mrb[0].mxu0
  %1079 = vmatprep.mubr.f32.mxu0 0.0
  %1080 = vmatmul.mubr.f32.gmra.mrb[0].mxu0 %v959
  %v1081 = vpop.f32.mrb[0].mxu0
  %v1082 = vadd.f32 %v973, %v1081
  %v1083 = vpop.f32.mrb[0].mxu0
  %1084 = vmatprep.mubr.f32.mxu0 0.0
  %1085 = vmatmul.mubr.f32.gmra.mrb[0].mxu0 %v960
  %v1086 = vpop.f32.mrb[0].mxu0
  %v1087 = vadd.f32 %v973, %v1086
  %v1088 = vpop.f32.mrb[0].mxu0
  %1089 = vmatprep.mubr.f32.mxu0 0.0
  %1090 = vmatmul.mubr.f32.gmra.mrb[0].mxu0 %v961
  %v1091 = vpop.f32.mrb[0].mxu0
  %v1092 = vadd.f32 %v973, %v1091
  %v1093 = vpop.f32.mrb[0].mxu0
  %1094 = vmatprep.mubr.f32.mxu0 0.0
  %1095 = vmatmul.mubr.f32.gmra.mrb[0].mxu0 %v962
  %v1096 = vpop.f32.mrb[0].mxu0
  %v1097 = vadd.f32 %v973, %v1096
  %v1098 = vpop.f32.mrb[0].mxu0
  %1099 = vmatprep.mubr.f32.mxu0 0.0
  %1100 = vmatmul.mubr.f32.gmra.mrb[0].mxu0 %v963
  %v1101 = vpop.f32.mrb[0].mxu0
  %v1102 = vadd.f32 %v973, %v1101
  %v1103 = vpop.f32.mrb[0].mxu0
  %1104 = vmatprep.mubr.f32.mxu0 0.0
  %1105 = vmatmul.mubr.f32.gmra.mrb[0].mxu0 %v964
  %v1106 = vpop.f32.mrb[0].mxu0
  %v1107 = vadd.f32 %v973, %v1106
  %v1108 = vpop.f32.mrb[0].mxu0
  %1109 = vmatprep.mubr.f32.mxu0 0.0
  %1110 = vmatmul.mubr.f32.gmra.mrb[0].mxu0 %v965
  %v1111 = vpop.f32.mrb[0].mxu0
  %v1112 = vadd.f32 %v973, %v1111
  %v1113 = vpop.f32.mrb[0].mxu0
  %1114 = vmatprep.mubr.f32.mxu0 0.0
  %1115 = vmatmul.mubr.f32.gmra.mrb[0].mxu0 %v966
  %v1116 = vpop.f32.mrb[0].mxu0
  %v1117 = vadd.f32 %v973, %v1116
  %v1118 = vpop.f32.mrb[0].mxu0
  %1119 = vdwg.mxu0
  %1120 = vst [vmem:[%s4] sm:$0xff] %v1042
  %1121 = vst [vmem:[%s4 + $0x8] sm:$0xff] %v1047
  %1122 = vst [vmem:[%s4 + $0x10] sm:$0xff] %v1052
  %1123 = vst [vmem:[%s4 + $0x18] sm:$0xff] %v1057
  %1124 = vst [vmem:[%s4 + $0x20] sm:$0xff] %v1062
  %1125 = vst [vmem:[%s4 + $0x28] sm:$0xff] %v1067
  %1126 = vst [vmem:[%s4 + $0x30] sm:$0xff] %v1072
  %1127 = vst [vmem:[%s4 + $0x38] sm:$0xff] %v1077
  %1128 = vst [vmem:[%s4 + $0x40] sm:$0xff] %v1082
  %1129 = vst [vmem:[%s4 + $0x48] sm:$0xff] %v1087
  %1130 = vst [vmem:[%s4 + $0x50] sm:$0xff] %v1092
  %1131 = vst [vmem:[%s4 + $0x58] sm:$0xff] %v1097
  %1132 = vst [vmem:[%s4 + $0x60] sm:$0xff] %v1102
  %1133 = vst [vmem:[%s4 + $0x68] sm:$0xff] %v1107
  %1134 = vst [vmem:[%s4 + $0x70] sm:$0xff] %v1112
  %1135 = vst [vmem:[%s4 + $0x78] sm:$0xff] %v1117
  // Predicated region
  $region18: #{gnn_forward.1} parent=0 // pred_check
    _
  $region19: #{gnn_forward.1} parent=0 // pred_check_branch
    %1137 = sbr.rel (0) target = $region21
  $region20: #{gnn_forward.1} parent=0 // pred_region
    _
  $region21: #{gnn_forward.1} parent=0 // pred_fallthru
    _
  // Predicated region
  $region22: #{gnn_forward.1} parent=0 // pred_check
    _
  $region23: #{gnn_forward.1} parent=0 // pred_check_branch
    %1139 = sbr.rel (0) target = $region25
  $region24: #{gnn_forward.1} parent=0 // pred_region
    _
  $region25: #{gnn_forward.1} parent=0 // pred_fallthru
    _

</llo_original>
